<compile_context>
chip_gen: v6e
topology: v6e:2x2x1
jax: 0.10.0
libtpu: 0.0.40
codegen_flags: <defaults>
</compile_context>

<pallas_src>
import functools

import jax
import jax.numpy as jnp
from jax.experimental import pallas as pl
from jax.experimental.pallas import tpu as pltpu


def _pick_c_block(n, c, hw, itemsize, budget_bytes=3 * 1024 * 1024):
    """Largest channel tile (divisor of C; multiple of 8, or C itself) whose
    fp32 input block fits the per-block byte budget."""
    cands = sorted({d for d in range(8, c + 1, 8) if c % d == 0} | {c})
    bytes_per_elem = max(int(itemsize), 4)  # in-kernel math is fp32
    best = cands[0]
    for cb in cands:
        if n * cb * hw * bytes_per_elem <= budget_bytes:
            best = cb
    return best


def _ibn_kernel(x_ref, gamma_ref, beta_ref, o_ref, *, half, c_blk, eps):
    x = x_ref[...].astype(jnp.float32)                 # (N, c_blk, HW)
    n = x.shape[0]
    hw = x.shape[-1]

    # ---- single-sweep statistics: per-(n, c) row sum / sum of squares ----
    s_nc = jnp.sum(x, axis=-1, keepdims=True)          # (N, c_blk, 1)
    q_nc = jnp.sum(x * x, axis=-1, keepdims=True)      # (N, c_blk, 1)

    r_hw = 1.0 / hw
    mean_in = s_nc * r_hw                              # InstanceNorm stats
    var_in = jnp.maximum(q_nc * r_hw - mean_in * mean_in, 0.0)

    r_nhw = 1.0 / (n * hw)                             # BatchNorm stats
    mean_bn = jnp.sum(s_nc, axis=0, keepdims=True) * r_nhw       # (1, c_blk, 1)
    var_bn = jnp.maximum(
        jnp.sum(q_nc, axis=0, keepdims=True) * r_nhw - mean_bn * mean_bn, 0.0)

    # ---- per-channel IN/BN selection, affine folded into scale/shift ----
    c0 = pl.program_id(0) * c_blk
    c_idx = c0 + jax.lax.broadcasted_iota(jnp.int32, (c_blk, 1), 0)  # (c_blk,1)
    is_in = c_idx < half

    mean = jnp.where(is_in, mean_in, mean_bn)                        # (N, c_blk, 1)
    inv = jnp.where(is_in,
                    jax.lax.rsqrt(var_in + eps),
                    jax.lax.rsqrt(var_bn + eps))                     # (N, c_blk, 1)

    gamma = gamma_ref[...]                                           # (c_blk, 1)
    beta = beta_ref[...]
    scale = gamma * inv
    shift = beta - mean * scale

    # ---- apply: 2 VALU ops / element, lane-dense store ----
    o_ref[...] = (x * scale + shift).astype(o_ref.dtype)


def ibn_forward(x, in_weight, in_bias, bn_weight, bn_bias, half):
    """x: (N, C, H, W) NCHW. Returns (N, C, H, W)."""
    N, C, H, W = x.shape
    HW = H * W
    eps = 1e-5

    # Free, contiguous reshape: spatial -> lane axis. No activation split/concat.
    x3 = x.reshape(N, C, HW)

    # Tiny O(C) parameter glue: one full-length gamma/beta vector per channel.
    gamma = jnp.concatenate([in_weight, bn_weight]).astype(jnp.float32).reshape(C, 1)
    beta = jnp.concatenate([in_bias, bn_bias]).astype(jnp.float32).reshape(C, 1)

    c_blk = _pick_c_block(N, C, HW, x.dtype.itemsize)
    grid = (C // c_blk,)

    kernel = functools.partial(_ibn_kernel, half=half, c_blk=c_blk, eps=eps)

    out = pl.pallas_call(
        kernel,
        out_shape=jax.ShapeDtypeStruct((N, C, HW), x.dtype),
        grid=grid,
        in_specs=[
            pl.BlockSpec((N, c_blk, HW), lambda i: (0, i, 0)),
            pl.BlockSpec((c_blk, 1), lambda i: (i, 0)),
            pl.BlockSpec((c_blk, 1), lambda i: (i, 0)),
        ],
        out_specs=pl.BlockSpec((N, c_blk, HW), lambda i: (0, i, 0)),
        compiler_params=pltpu.CompilerParams(
            dimension_semantics=("parallel",),
            vmem_limit_bytes=32 * 1024 * 1024,
        ),
    )(x3, gamma, beta)

    return out.reshape(N, C, H, W)


def ibn_reference(x, in_weight, in_bias, bn_weight, bn_bias, half):
    """Pure-JAX reference matching PyTorch IBN (training-mode BN)."""
    eps = 1e-5
    x = x.astype(jnp.float32)
    x_in = x[:, :half]
    x_bn = x[:, half:]

    m = jnp.mean(x_in, axis=(2, 3), keepdims=True)
    v = jnp.mean((x_in - m) ** 2, axis=(2, 3), keepdims=True)
    o1 = (x_in - m) / jnp.sqrt(v + eps)
    o1 = o1 * in_weight.reshape(1, -1, 1, 1) + in_bias.reshape(1, -1, 1, 1)

    m2 = jnp.mean(x_bn, axis=(0, 2, 3), keepdims=True)
    v2 = jnp.mean((x_bn - m2) ** 2, axis=(0, 2, 3), keepdims=True)
    o2 = (x_bn - m2) / jnp.sqrt(v2 + eps)
    o2 = o2 * bn_weight.reshape(1, -1, 1, 1) + bn_bias.reshape(1, -1, 1, 1)

    return jnp.concatenate([o1, o2], axis=1)


if __name__ == "__main__":
    # IBN(planes=4, ratio=0.5) -> half = 2
    planes, ratio = 4, 0.5
    half = int(planes * ratio)

    N, C, H, W = 2, planes, 16, 16
    key = jax.random.PRNGKey(0)
    x = jax.random.normal(key, (N, C, H, W), dtype=jnp.float32)

    # Deterministic, non-trivial affine parameters (shapes per nn module init).
    in_weight = jnp.linspace(0.5, 1.5, half, dtype=jnp.float32)           # IN.weight
    in_bias = jnp.linspace(-0.2, 0.2, half, dtype=jnp.float32)            # IN.bias
    bn_weight = jnp.linspace(0.8, 1.2, planes - half, dtype=jnp.float32)  # BN.weight
    bn_bias = jnp.linspace(-0.1, 0.1, planes - half, dtype=jnp.float32)   # BN.bias

    out = ibn_forward(x, in_weight, in_bias, bn_weight, bn_bias, half)
    out = jax.block_until_ready(out)

    ref = ibn_reference(x, in_weight, in_bias, bn_weight, bn_bias, half)
    assert out.shape == (N, C, H, W)
    assert jnp.allclose(out, ref, atol=2e-5, rtol=2e-5), "mismatch vs reference"

    print("KERNEL_OK")
</pallas_src>

<mosaic_0001>
module attributes {stable_mosaic.version = 11 : i64} {
  func.func @_ibn_kernel(%arg0: i32, %arg1: memref<2x4x256xf32, #tpu.memory_space<vmem>>, %arg2: memref<4x1xf32, #tpu.memory_space<vmem>>, %arg3: memref<4x1xf32, #tpu.memory_space<vmem>>, %arg4: memref<2x4x256xf32, #tpu.memory_space<vmem>>) attributes {dimension_semantics = [#tpu.dimension_semantics<parallel>], iteration_bounds = array<i64: 1>, scalar_prefetch = 0 : i64, scratch_operands = 0 : i64, tpu.core_type = #tpu.core_type<tc>, window_params = [{transform_indices = @transform_0, window_bounds = array<i64: 2, 4, 256>}, {transform_indices = @transform_1, window_bounds = array<i64: 4, 1>}, {transform_indices = @transform_2, window_bounds = array<i64: 4, 1>}, {transform_indices = @transform_3, window_bounds = array<i64: 2, 4, 256>}]} {
    %c0 = arith.constant 0 : index
    %c0_0 = arith.constant 0 : index
    %c0_1 = arith.constant 0 : index
    %0 = vector.load %arg1[%c0, %c0_0, %c0_1] : memref<2x4x256xf32, #tpu.memory_space<vmem>>, vector<2x4x256xf32>
    %cst = arith.constant dense<0.000000e+00> : vector<2x4xf32>
    %1 = vector.multi_reduction <add>, %0, %cst [2] : vector<2x4x256xf32> to vector<2x4xf32>
    %2 = vector.shape_cast %1 : vector<2x4xf32> to vector<2x4x1xf32>
    %3 = arith.mulf %0, %0 : vector<2x4x256xf32>
    %cst_2 = arith.constant dense<0.000000e+00> : vector<2x4xf32>
    %4 = vector.multi_reduction <add>, %3, %cst_2 [2] : vector<2x4x256xf32> to vector<2x4xf32>
    %5 = vector.shape_cast %4 : vector<2x4xf32> to vector<2x4x1xf32>
    %cst_3 = arith.constant 3.906250e-03 : f32
    %6 = vector.broadcast %cst_3 : f32 to vector<2x4x1xf32>
    %7 = arith.mulf %2, %6 : vector<2x4x1xf32>
    %cst_4 = arith.constant 3.906250e-03 : f32
    %8 = vector.broadcast %cst_4 : f32 to vector<2x4x1xf32>
    %9 = arith.mulf %5, %8 : vector<2x4x1xf32>
    %10 = arith.mulf %7, %7 : vector<2x4x1xf32>
    %11 = arith.subf %9, %10 : vector<2x4x1xf32>
    %cst_5 = arith.constant 0.000000e+00 : f32
    %12 = vector.broadcast %cst_5 : f32 to vector<2x4x1xf32>
    %13 = arith.maximumf %11, %12 : vector<2x4x1xf32>
    %cst_6 = arith.constant dense<0.000000e+00> : vector<4x1xf32>
    %14 = vector.multi_reduction <add>, %2, %cst_6 [0] : vector<2x4x1xf32> to vector<4x1xf32>
    %15 = vector.shape_cast %14 : vector<4x1xf32> to vector<1x4x1xf32>
    %cst_7 = arith.constant 0.001953125 : f32
    %16 = vector.broadcast %cst_7 : f32 to vector<1x4x1xf32>
    %17 = arith.mulf %15, %16 : vector<1x4x1xf32>
    %cst_8 = arith.constant dense<0.000000e+00> : vector<4x1xf32>
    %18 = vector.multi_reduction <add>, %5, %cst_8 [0] : vector<2x4x1xf32> to vector<4x1xf32>
    %19 = vector.shape_cast %18 : vector<4x1xf32> to vector<1x4x1xf32>
    %cst_9 = arith.constant 0.001953125 : f32
    %20 = vector.broadcast %cst_9 : f32 to vector<1x4x1xf32>
    %21 = arith.mulf %19, %20 : vector<1x4x1xf32>
    %22 = arith.mulf %17, %17 : vector<1x4x1xf32>
    %23 = arith.subf %21, %22 : vector<1x4x1xf32>
    %cst_10 = arith.constant 0.000000e+00 : f32
    %24 = vector.broadcast %cst_10 : f32 to vector<1x4x1xf32>
    %25 = arith.maximumf %23, %24 : vector<1x4x1xf32>
    %c4_i32 = arith.constant 4 : i32
    %26 = arith.muli %arg0, %c4_i32 : i32
    %27 = tpu.iota {dimensions = array<i32: 0>} : vector<4x1xi32>
    %28 = vector.broadcast %26 : i32 to vector<4x1xi32>
    %29 = arith.addi %28, %27 : vector<4x1xi32>
    %c2_i32 = arith.constant 2 : i32
    %30 = vector.broadcast %c2_i32 : i32 to vector<4x1xi32>
    %31 = arith.cmpi slt, %29, %30 : vector<4x1xi32>
    %32 = vector.shape_cast %31 : vector<4x1xi1> to vector<1x4x1xi1>
    %33 = vector.broadcast %32 : vector<1x4x1xi1> to vector<2x4x1xi1>
    %34 = vector.shape_cast %17 : vector<1x4x1xf32> to vector<1x4x1xf32>
    %35 = vector.broadcast %34 : vector<1x4x1xf32> to vector<2x4x1xf32>
    %36 = arith.select %33, %7, %35 : vector<2x4x1xi1>, vector<2x4x1xf32>
    %cst_11 = arith.constant 9.99999974E-6 : f32
    %37 = vector.broadcast %cst_11 : f32 to vector<2x4x1xf32>
    %38 = arith.addf %13, %37 : vector<2x4x1xf32>
    %39 = math.rsqrt %38 : vector<2x4x1xf32>
    %cst_12 = arith.constant 9.99999974E-6 : f32
    %40 = vector.broadcast %cst_12 : f32 to vector<1x4x1xf32>
    %41 = arith.addf %25, %40 : vector<1x4x1xf32>
    %42 = math.rsqrt %41 : vector<1x4x1xf32>
    %43 = vector.shape_cast %31 : vector<4x1xi1> to vector<1x4x1xi1>
    %44 = vector.broadcast %43 : vector<1x4x1xi1> to vector<2x4x1xi1>
    %45 = vector.shape_cast %42 : vector<1x4x1xf32> to vector<1x4x1xf32>
    %46 = vector.broadcast %45 : vector<1x4x1xf32> to vector<2x4x1xf32>
    %47 = arith.select %44, %39, %46 : vector<2x4x1xi1>, vector<2x4x1xf32>
    %c0_13 = arith.constant 0 : index
    %c0_14 = arith.constant 0 : index
    %48 = vector.load %arg2[%c0_13, %c0_14] : memref<4x1xf32, #tpu.memory_space<vmem>>, vector<4x1xf32>
    %c0_15 = arith.constant 0 : index
    %c0_16 = arith.constant 0 : index
    %49 = vector.load %arg3[%c0_15, %c0_16] : memref<4x1xf32, #tpu.memory_space<vmem>>, vector<4x1xf32>
    %50 = vector.shape_cast %48 : vector<4x1xf32> to vector<1x4x1xf32>
    %51 = vector.broadcast %50 : vector<1x4x1xf32> to vector<2x4x1xf32>
    %52 = arith.mulf %51, %47 : vector<2x4x1xf32>
    %53 = arith.mulf %36, %52 : vector<2x4x1xf32>
    %54 = vector.shape_cast %49 : vector<4x1xf32> to vector<1x4x1xf32>
    %55 = vector.broadcast %54 : vector<1x4x1xf32> to vector<2x4x1xf32>
    %56 = arith.subf %55, %53 : vector<2x4x1xf32>
    %57 = vector.broadcast %52 : vector<2x4x1xf32> to vector<2x4x256xf32>
    %58 = arith.mulf %0, %57 : vector<2x4x256xf32>
    %59 = vector.broadcast %56 : vector<2x4x1xf32> to vector<2x4x256xf32>
    %60 = arith.addf %58, %59 : vector<2x4x256xf32>
    %c0_17 = arith.constant 0 : index
    %c0_18 = arith.constant 0 : index
    %c0_19 = arith.constant 0 : index
    %61 = vector.load %arg4[%c0_17, %c0_18, %c0_19] : memref<2x4x256xf32, #tpu.memory_space<vmem>>, vector<2x4x256xf32>
    tpu.vector_store %arg4[%c0_17, %c0_18, %c0_19], %60 {strides = array<i32>} : memref<2x4x256xf32, #tpu.memory_space<vmem>>, vector<2x4x256xf32>,
    return
  }
  func.func @transform_0(%arg0: i32) -> (i32, i32, i32) {
    %c0_i32 = arith.constant 0 : i32
    %c0_i32_0 = arith.constant 0 : i32
    %c0_i32_1 = arith.constant 0 : i32
    return %c0_i32, %arg0, %c0_i32_0 : i32, i32, i32
  }
  func.func @transform_1(%arg0: i32) -> (i32, i32) {
    %c0_i32 = arith.constant 0 : i32
    %c0_i32_0 = arith.constant 0 : i32
    return %arg0, %c0_i32 : i32, i32
  }
  func.func @transform_2(%arg0: i32) -> (i32, i32) {
    %c0_i32 = arith.constant 0 : i32
    %c0_i32_0 = arith.constant 0 : i32
    return %arg0, %c0_i32 : i32, i32
  }
  func.func @transform_3(%arg0: i32) -> (i32, i32, i32) {
    %c0_i32 = arith.constant 0 : i32
    %c0_i32_0 = arith.constant 0 : i32
    %c0_i32_1 = arith.constant 0 : i32
    return %c0_i32, %arg0, %c0_i32_0 : i32, i32, i32
  }
}

</mosaic_0001>

<llo_original>
// kernel: tpu_custom_call.1
$region0: #{tpu_custom_call.1}
  #allocation0 [shape = 'u32[]', space=smem, size = 0x4, offset = 0x4, fixed_abs, tag = 'smem constant byte address 0x4 - core index']
  #allocation1 [shape = 'u32[144,128]{1,0:T(1,128)}', space=vmem, size = 0x12000, scoped, tag = 'internal scratch']
  %s0 = inlined_call_operand.hbm [shape: f32[2,4,256], index: 0, kind: input, shape index: {}]
  %s1 = inlined_call_operand.vmem [shape: f32[4,1], index: 1, kind: input, shape index: {}]
  %s2 = inlined_call_operand.vmem [shape: f32[4,1], index: 2, kind: input, shape index: {}]
  %s3 = inlined_call_operand.hbm [shape: f32[2,4,256], index: 3, kind: output, shape index: {}]
  %s4 = sld [smem:[#allocation0]]
  $region26: #{tpu_custom_call.1} parent=0
    _
  %s6 = ssub.s32 1, %s4
  %s7 = scalar_select 0, %s6, %s4
  $region1: #{tpu_custom_call.1} parent=0
    #allocation2 [shape = 'u8[8192]{0}', space=vmem, size = 0x2000, scoped, tag = 'input window, operand 0, single buffered']
    #allocation3 [shape = 's32[1]{0}', space=sflag, size = 0x4, scoped, tag = 'scoped memory for tpu_custom_call.1']
    #allocation4 [shape = 's32[1]{0}', space=sflag, size = 0x4, scoped, tag = 'scoped memory for tpu_custom_call.1']
    #allocation5 [shape = 'u8[8192]{0}', space=vmem, size = 0x2000, scoped, tag = 'output window, operand 0, single buffered']
    %8 = vsyncpa [#allocation3], 0
    %9 = vsyncpa [#allocation4], 0
    // Predicated region
    $region2: #{tpu_custom_call.1} parent=1 // pred_check
      _
    $region3: #{tpu_custom_call.1} parent=1 // pred_check_branch
      %11 = sbr.rel (0) target = $region5
    $region4: #{tpu_custom_call.1} parent=1 // pred_region
      %s13 = ssub.s32 256, 256
      %14 = vsyncadd [#allocation3], %s13
      %s15 = sshll.u32 [#allocation2], 4
      %s16 = int_to_ptr.vmem [resolvable:$true] %s15
      %21 = dma.hbm_to_vmem [thread:$0]  %s0, 256, %s16, [#allocation3], 128, 128, 8
    $region5: #{tpu_custom_call.1} parent=1 // pred_fallthru
      _
    // Predicated region
    $region6: #{tpu_custom_call.1} parent=1 // pred_check
      _
    $region7: #{tpu_custom_call.1} parent=1 // pred_check_branch
      %23 = sbr.rel (0) target = $region9
    $region8: #{tpu_custom_call.1} parent=1 // pred_region
      _
    $region9: #{tpu_custom_call.1} parent=1 // pred_fallthru
      _
    // Predicated region
    $region10: #{tpu_custom_call.1} parent=1 // pred_check
      _
    $region11: #{tpu_custom_call.1} parent=1 // pred_check_branch
      %25 = sbr.rel (0) target = $region13
    $region12: #{tpu_custom_call.1} parent=1 // pred_region
      _
    $region13: #{tpu_custom_call.1} parent=1 // pred_fallthru
      _
    // Predicated region
    $region14: #{tpu_custom_call.1} parent=1 // pred_check
      _
    $region15: #{tpu_custom_call.1} parent=1 // pred_check_branch
      %27 = sbr.rel (0) target = $region17
    $region16: #{tpu_custom_call.1} parent=1 // pred_region
      %28 = dma.done [#allocation3], 256
    $region17: #{tpu_custom_call.1} parent=1 // pred_fallthru
      _
    %v29 = vld [vmem:[#allocation2] sm:$0xff]
    %v30 = vld [vmem:[#allocation2 + $0x8] sm:$0xff]
    %v33 = vcombine.high %v29, %v29
    %v34 = vcombine.high %v30, %v30
    %vm37 = vcmask 1043456
    %v38 = vsel %vm37, %v29, 0.0
    %v39 = vsel %vm37, %v33, 0.0
    %v40 = vadd.f32 %v38, %v39
    %41 = vadd.xlane.f32.xlu0 %v40
    %v42 = vpop.xlane.xlu0 %41
    %v43 = vsel %vm37, %v30, 0.0
    %v44 = vsel %vm37, %v34, 0.0
    %v45 = vadd.f32 %v43, %v44
    %46 = vadd.xlane.f32.xlu0 %v45
    %v47 = vpop.xlane.xlu0 %46
    %v48 = vmul.f32 %v29, %v29
    %v49 = vmul.f32 %v30, %v30
    %v52 = vcombine.high %v48, %v48
    %v53 = vcombine.high %v49, %v49
    %v56 = vsel %vm37, %v48, 0.0
    %v57 = vsel %vm37, %v52, 0.0
    %v58 = vadd.f32 %v56, %v57
    %59 = vadd.xlane.f32.xlu0 %v58
    %v60 = vpop.xlane.xlu0 %59
    %v61 = vsel %vm37, %v49, 0.0
    %v62 = vsel %vm37, %v53, 0.0
    %v63 = vadd.f32 %v61, %v62
    %64 = vadd.xlane.f32.xlu0 %v63
    %v65 = vpop.xlane.xlu0 %64
    %v66 = vmul.f32 %v42, 0.00390625
    %v67 = vmul.f32 %v47, 0.00390625
    %v68 = vmul.f32 %v60, 0.00390625
    %v69 = vmul.f32 %v65, 0.00390625
    %v70 = vmul.f32 %v66, %v66
    %v71 = vmul.f32 %v67, %v67
    %v72 = vsub.f32 %v68, %v70
    %v73 = vsub.f32 %v69, %v71
    %v74 = vmax.f32 %v72, 0.0
    %v75 = vmax.f32 %v73, 0.0
    %v76 = vsel %vm37, %v42, 0.0
    %v77 = vsel %vm37, %v47, 0.0
    %v78 = vadd.f32 %v76, %v77
    %v79 = vmul.f32 %v78, 0.001953125
    %v80 = vsel %vm37, %v60, 0.0
    %v81 = vsel %vm37, %v65, 0.0
    %v82 = vadd.f32 %v80, %v81
    %v83 = vmul.f32 %v82, 0.001953125
    %v84 = vmul.f32 %v79, %v79
    %v85 = vsub.f32 %v83, %v84
    %v86 = vmax.f32 %v85, 0.0
    %s87 = smul.u32 0, 4
    %v88 = vlaneseq
    %v89 = vshrl.u32 %v88, 7
    %v90 = vstv %s87
    %v91 = vadd.s32 %v90, %v89
    %vm92 = vcmp.lt.s32.totalorder %v91, 2
    %v93 = vsel %vm92, 1, 0
    %vm94 = vcmp.eq.s32.totalorder %v93, 1
    %v95 = vsel %vm94, %v66, %v79
    %v96 = vsel %vm94, %v67, %v79
    %v97 = vadd.f32 %v74, 1e-05
    %v98 = vadd.f32 %v75, 1e-05
    %v99 = vrsqrt.pop %v97
    %v100 = vrsqrt.pop %v98
    %v101 = vadd.f32 %v86, 1e-05
    %v102 = vrsqrt.pop %v101
    %v103 = vsel %vm94, %v99, %v102
    %v104 = vsel %vm94, %v100, %v102
    %v105 = vld [vmem:[%s1] sm:$0xf]
    %v106 = vld [vmem:[%s2] sm:$0xf]
    %v107 = vmul.f32 %v105, %v103
    %v108 = vmul.f32 %v105, %v104
    %v109 = vmul.f32 %v95, %v107
    %v110 = vmul.f32 %v96, %v108
    %v111 = vsub.f32 %v106, %v109
    %v112 = vsub.f32 %v106, %v110
    %114 = vset.pattern.permute.xlu0 0
    %115 = vperm.xlu0 %114, %v107
    %v116 = vpop.permute.xlu0 %115
    %118 = vset.pattern.permute.xlu0 0
    %119 = vperm.xlu0 %118, %v108
    %v120 = vpop.permute.xlu0 %119
    %v122 = vunpack.c.l.s4 839922192
    %v123 = vunpack.c.0.s8 %v122
    %v124 = vlaneseq
    %v125 = vshrl.u32 %v124, 7
    %v126 = vsub.s32 %v123, %v125
    %v127 = vrot.slane %v116, %v126
    %v129 = vunpack.c.l.s4 839922192
    %v130 = vunpack.c.0.s8 %v129
    %v131 = vlaneseq
    %v132 = vshrl.u32 %v131, 7
    %v133 = vsub.s32 %v130, %v132
    %v134 = vrot.slane %v120, %v133
    %v137 = vmul.f32 %v29, %v127
    %v138 = vmul.f32 %v30, %v134
    %140 = vset.pattern.permute.xlu0 0
    %141 = vperm.xlu0 %140, %v111
    %v142 = vpop.permute.xlu0 %141
    %144 = vset.pattern.permute.xlu0 0
    %145 = vperm.xlu0 %144, %v112
    %v146 = vpop.permute.xlu0 %145
    %v148 = vunpack.c.l.s4 839922192
    %v149 = vunpack.c.0.s8 %v148
    %v150 = vlaneseq
    %v151 = vshrl.u32 %v150, 7
    %v152 = vsub.s32 %v149, %v151
    %v153 = vrot.slane %v142, %v152
    %v155 = vunpack.c.l.s4 839922192
    %v156 = vunpack.c.0.s8 %v155
    %v157 = vlaneseq
    %v158 = vshrl.u32 %v157, 7
    %v159 = vsub.s32 %v156, %v158
    %v160 = vrot.slane %v146, %v159
    %v163 = vadd.f32 %v137, %v153
    %v164 = vadd.f32 %v138, %v160
    %165 = vst [vmem:[#allocation5] sm:$0xff] %v163
    %166 = vst [vmem:[#allocation5 + $0x8] sm:$0xff] %v164
    // Predicated region
    $region18: #{tpu_custom_call.1} parent=1 // pred_check
      _
    $region19: #{tpu_custom_call.1} parent=1 // pred_check_branch
      %168 = sbr.rel (0) target = $region21
    $region20: #{tpu_custom_call.1} parent=1 // pred_region
      %s170 = ssub.s32 256, 256
      %171 = vsyncadd [#allocation4], %s170
      %s172 = sshll.u32 [#allocation5], 4
      %s173 = int_to_ptr.vmem [resolvable:$true] %s172
      %178 = dma.vmem_to_hbm [thread:$0]  %s173, 256, %s3, [#allocation4], 128, 128, 8
    $region21: #{tpu_custom_call.1} parent=1 // pred_fallthru
      _
    // Predicated region
    $region22: #{tpu_custom_call.1} parent=1 // pred_check
      _
    $region23: #{tpu_custom_call.1} parent=1 // pred_check_branch
      %180 = sbr.rel (0) target = $region25
    $region24: #{tpu_custom_call.1} parent=1 // pred_region
      %181 = dma.done [#allocation4], 256
    $region25: #{tpu_custom_call.1} parent=1 // pred_fallthru
      _
    %182 = vsyncpa [#allocation3], 1
    %183 = vsyncpa [#allocation4], 1

</llo_original>
